<compile_context>
chip_gen: v5e
topology: v5e:2x2
jax: 0.10.0
libtpu: 0.0.40
codegen_flags: <defaults>
</compile_context>

<pallas_src>
import jax
import jax.numpy as jnp
from jax import lax
from jax.experimental import pallas as pl
from jax.experimental.pallas import tpu as pltpu

LANE = 128


def _round_up(v, m):
    return (v + m - 1) // m * m


def _tpu_vmem_capacity():
    try:
        return int(pltpu.get_tpu_info().vmem_capacity_bytes)
    except Exception:          # older jax / attribute rename: assume the small case
        return 64 * 1024 * 1024


def _vmem_limit_bytes():
    # Leave headroom below the physical capacity: v7x 64 MiB -> ~56 MiB,
    # v5e/v6e 128 MiB -> 100 MiB.
    cap = _tpu_vmem_capacity()
    return max(16 * 1024 * 1024, min(cap - 8 * 1024 * 1024, 100 * 1024 * 1024))


def _default_conv_impl():
    # Small-VMEM / MRB chips (v7x-class) -> scratch-free k^2 accumulating
    # matmuls; large-VMEM chips (v5e/v6e) -> tiled im2col (one big-K matmul).
    return "k2" if _tpu_vmem_capacity() <= 64 * 1024 * 1024 else "im2col"


def _pick_tile_h(H, W, tile_rows):
    # Largest divisor of H whose conv row tile (th*W matmul rows) fits tile_rows.
    target = max(1, tile_rows // max(W, 1))
    th = 1
    for d in range(1, H + 1):
        if H % d == 0 and d <= target:
            th = d
    return th


# --------------------------- in-kernel helpers ------------------------------
def _fill_padded(pad_ref, a, H, W, Cin, Cpi, p):
    """Write BN+ReLU'd activations `a` ((H*W, Cin) f32) into the zero-padded
    bf16 conv-input buffer pad_ref ((H+2p, W+2p, Cpi))."""
    Hp, Wp = H + 2 * p, W + 2 * p
    a = a.astype(jnp.bfloat16).reshape(H, W, Cin)
    if Cin == Cpi:
        # Channels already lane-aligned (production shapes): zero only the halo,
        # the interior is one full-lane-width store.
        zr = jnp.zeros((p, Wp, Cpi), jnp.bfloat16)
        pad_ref[0:p, :, :] = zr
        pad_ref[Hp - p:Hp, :, :] = zr
        zc = jnp.zeros((H, p, Cpi), jnp.bfloat16)
        pad_ref[p:p + H, 0:p, :] = zc
        pad_ref[p:p + H, Wp - p:Wp, :] = zc
        pad_ref[p:p + H, p:p + W, :] = a
    else:
        # Narrow-channel case (toy shapes): lanes >= Cin are logically part of
        # the conv's K dimension, so they must be real zeros (never scratch
        # garbage -> 0*NaN).  A single full-buffer zero handles halo + lane
        # padding; the buffer is tiny at these channel counts.
        pad_ref[...] = jnp.zeros(pad_ref.shape, pad_ref.dtype)
        pad_ref[p:p + H, p:p + W, 0:Cin] = a


def _conv_tile(pad_ref, col_ref, w_ref, r0, th, W, k, Cp, use_im2col):
    """kxk 'same' conv for image rows [r0, r0+th): returns (th*W, Cout) f32."""
    tm = th * W
    if use_im2col:
        # v5e/v6e path: per-tile im2col fill (lane-aligned 128-wide column
        # blocks) + ONE MXU matmul with K = k*k*Cp.
        # NOTE: the dx slice shifts the sublane (W) axis -> Mosaic emits
        # sublane-shifted copies; acceptable while the conv is MXU/DMA bound.
        for dy in range(k):
            for dx in range(k):
                j = dy * k + dx
                col_ref[:, j * Cp:(j + 1) * Cp] = (
                    pad_ref[r0 + dy:r0 + dy + th, dx:dx + W, :].reshape(tm, Cp))
        return jnp.dot(col_ref[...], w_ref[...],
                       preferred_element_type=jnp.float32)
    # v7x path: k*k accumulating matmuls, no col scratch (MRB accumulates in
    # the MXU result buffer; removes the im2col fill store passes entirely).
    acc = None
    for dy in range(k):
        for dx in range(k):
            win = pad_ref[r0 + dy:r0 + dy + th, dx:dx + W, :].reshape(tm, Cp)
            part = jnp.dot(win, w_ref[dy * k + dx],
                           preferred_element_type=jnp.float32)
            acc = part if acc is None else acc + part
    return acc


# ------------------------------ kernels --------------------------------------
def _make_stats_kernel(H, W, C):
    def kernel(x_ref, st_ref):
        x = x_ref[...].reshape(H * W, C).astype(jnp.float32)
        st_ref[0, 0:1, :] = jnp.sum(x, axis=0, keepdims=True)
        st_ref[0, 1:2, :] = jnp.sum(x * x, axis=0, keepdims=True)
    return kernel


def _make_conv1_kernel(H, W, Cin, Cpi, k, p, th, use_im2col):
    n_tiles = H // th

    def kernel(x_ref, sc_ref, sh_ref, w_ref, h_ref, st_ref, pad_ref, *col):
        col_ref = col[0] if use_im2col else None
        # BN1 + ReLU fused with the bf16 cast / padded-buffer fill (no full
        # f32 post-BN tensor survives past this point).
        x = x_ref[...].reshape(H * W, Cin).astype(jnp.float32)
        a = jnp.maximum(x * sc_ref[...] + sh_ref[...], 0.0)
        _fill_padded(pad_ref, a, H, W, Cin, Cpi, p)

        s = jnp.zeros((1, Cin), jnp.float32)
        ss = jnp.zeros((1, Cin), jnp.float32)
        for t in range(n_tiles):
            out = _conv_tile(pad_ref, col_ref, w_ref, t * th, th, W, k, Cpi,
                             use_im2col)                     # (th*W, Cin) f32
            # BN2 partial sums from the f32 accumulator (before bf16 rounding).
            s = s + jnp.sum(out, axis=0, keepdims=True)
            ss = ss + jnp.sum(out * out, axis=0, keepdims=True)
            h_ref[0, t * th:(t + 1) * th, :, :] = (
                out.astype(jnp.bfloat16).reshape(th, W, Cin))
        st_ref[0, 0:1, :] = s
        st_ref[0, 1:2, :] = ss

    return kernel


def _make_conv2_kernel(H, W, Cin, Cout, Cpi, k, p, th, use_im2col, has_proj):
    n_tiles = H // th

    def kernel(*refs):
        n_in = 8 if has_proj else 6
        if has_proj:
            h_ref, x_ref, sc_ref, sh_ref, w_ref, b_ref, wc_ref, bc_ref = refs[:n_in]
        else:
            h_ref, x_ref, sc_ref, sh_ref, w_ref, b_ref = refs[:n_in]
            wc_ref = bc_ref = None
        out_ref, pad_ref = refs[n_in], refs[n_in + 1]
        col_ref = refs[n_in + 2] if use_im2col else None

        h = h_ref[...].reshape(H * W, Cin).astype(jnp.float32)
        a = jnp.maximum(h * sc_ref[...] + sh_ref[...], 0.0)
        _fill_padded(pad_ref, a, H, W, Cin, Cpi, p)

        x = x_ref[...].reshape(H * W, Cin)                   # bf16 residual input
        for t in range(n_tiles):
            out = _conv_tile(pad_ref, col_ref, w_ref, t * th, th, W, k, Cpi,
                             use_im2col) + b_ref[...]        # (th*W, Cout) f32
            xs = x[t * th * W:(t + 1) * th * W, :]
            if has_proj:
                res = jnp.dot(xs, wc_ref[...],
                              preferred_element_type=jnp.float32) + bc_ref[...]
            else:
                res = xs.astype(jnp.float32)
            out_ref[0, t * th:(t + 1) * th, :, :] = (out + res).reshape(th, W, Cout)

    return kernel


# ------------------------------ wrapper ---------------------------------------
def resblock2d_forward(x_nchw, params, *, kernel_size, padding, eps=1e-5,
                       tile_rows=512, conv_impl="auto"):
    """Pallas TPU implementation of ResBlock2d.forward (NCHW in / NCHW out)."""
    N, Cin, H, W = x_nchw.shape
    k = kernel_size
    Cout = params["w2"].shape[-1]
    has_proj = Cin != Cout
    # The residual add in the PyTorch module only shape-checks with 'same' padding.
    assert k % 2 == 1 and padding == (k - 1) // 2, "ResBlock2d requires same padding"
    if conv_impl == "auto":
        conv_impl = _default_conv_impl()
    use_im2col = conv_impl == "im2col"

    Cpi = _round_up(Cin, LANE)              # lane-padded K channels (VMEM only)
    th = _pick_tile_h(H, W, tile_rows)      # image rows per conv tile
    Hp, Wp = H + 2 * padding, W + 2 * padding
    hw_total = float(N * H * W)

    # NCHW -> NHWC, bf16: real channel count only (no HBM channel padding) and
    # half the DMA bytes of the previous f32 path.
    # TODO(synk): fold this relayout into phase A to also drop the one remaining
    # XLA copy of the real-sized input.
    x = jnp.transpose(x_nchw, (0, 2, 3, 1)).astype(jnp.bfloat16)

    def conv_w(w):                          # (k,k,ci,co) HWIO -> MXU operand, bf16
        ci, co = w.shape[2], w.shape[3]
        wp = jnp.pad(w.astype(jnp.float32),
                     ((0, 0), (0, 0), (0, Cpi - ci), (0, 0))).astype(jnp.bfloat16)
        if use_im2col:
            return wp.reshape(k * k * Cpi, co)      # row = (dy*k+dx)*Cpi + ci
        return wp.reshape(k * k, Cpi, co)           # tap-major for k^2 matmuls

    w1 = conv_w(params["w1"])
    w2 = conv_w(params["w2"])
    b2 = params["b2"].astype(jnp.float32).reshape(1, Cout)

    def full_spec(shape):
        return pl.BlockSpec(shape, lambda n: (0,) * len(shape))

    img_in_spec = pl.BlockSpec((1, H, W, Cin), lambda n: (n, 0, 0, 0))
    stat_spec = pl.BlockSpec((1, 2, Cin), lambda n: (n, 0, 0))
    cparams = pltpu.CompilerParams(
        dimension_semantics=("parallel",),          # megacore-shard images on v7x
        vmem_limit_bytes=_vmem_limit_bytes())
    scratch = [pltpu.VMEM((Hp, Wp, Cpi), jnp.bfloat16)]
    if use_im2col:
        scratch.append(pltpu.VMEM((th * W, k * k * Cpi), jnp.bfloat16))

    # ---------------- phase A: BN1 batch statistics ----------------
    stats1 = pl.pallas_call(
        _make_stats_kernel(H, W, Cin),
        grid=(N,),
        in_specs=[img_in_spec],
        out_specs=stat_spec,
        out_shape=jax.ShapeDtypeStruct((N, 2, Cin), jnp.float32),
        compiler_params=cparams,
    )(x)

    def scale_shift(stats, gamma, beta):
        s = jnp.sum(stats, axis=0)                  # (2, C) over images
        mean = s[0] / hw_total
        var = jnp.maximum(s[1] / hw_total - mean * mean, 0.0)
        scale = gamma.astype(jnp.float32) * lax.rsqrt(var + eps)
        shift = beta.astype(jnp.float32) - mean * scale
        return scale.reshape(1, -1), shift.reshape(1, -1)

    sc1, sh1 = scale_shift(stats1, params["gamma1"], params["beta1"])

    # --------- phase B: BN1 + ReLU + conv1, BN2 partial statistics ---------
    # conv1's bias (params["b1"]) is intentionally unused: a conv bias that is
    # immediately followed by batch-statistics BatchNorm cancels exactly.
    h, stats2 = pl.pallas_call(
        _make_conv1_kernel(H, W, Cin, Cpi, k, padding, th, use_im2col),
        grid=(N,),
        in_specs=[img_in_spec, full_spec((1, Cin)), full_spec((1, Cin)),
                  full_spec(w1.shape)],
        out_specs=(img_in_spec, stat_spec),
        out_shape=(jax.ShapeDtypeStruct((N, H, W, Cin), jnp.bfloat16),
                   jax.ShapeDtypeStruct((N, 2, Cin), jnp.float32)),
        scratch_shapes=scratch,
        compiler_params=cparams,
    )(x, sc1, sh1, w1)

    sc2, sh2 = scale_shift(stats2, params["gamma2"], params["beta2"])

    # --------- phase C: BN2 + ReLU + conv2 + bias + residual ---------
    args = [h, x, sc2, sh2, w2, b2]
    in_specs = [img_in_spec, img_in_spec, full_spec((1, Cin)),
                full_spec((1, Cin)), full_spec(w2.shape), full_spec((1, Cout))]
    if has_proj:
        wc = params["wc"].astype(jnp.bfloat16)      # (Cin, Cout) 1x1 conv
        bc = params["bc"].astype(jnp.float32).reshape(1, Cout)
        args += [wc, bc]
        in_specs += [full_spec(wc.shape), full_spec((1, Cout))]

    out_nhwc = pl.pallas_call(
        _make_conv2_kernel(H, W, Cin, Cout, Cpi, k, padding, th, use_im2col,
                           has_proj),
        grid=(N,),
        in_specs=in_specs,
        out_specs=pl.BlockSpec((1, H, W, Cout), lambda n: (n, 0, 0, 0)),
        out_shape=jax.ShapeDtypeStruct((N, H, W, Cout), jnp.float32),
        scratch_shapes=scratch,
        compiler_params=cparams,
    )(*args)

    # Only the real Cout channels are written; back to the module's NCHW
    # interface.  TODO(synk): hand the NHWC tensor straight to the consumer to
    # drop this copy when the surrounding model is also channels-last.
    return jnp.transpose(out_nhwc, (0, 3, 1, 2))


# ---------------- pure-JAX reference (for correctness check) ----------------
def resblock2d_reference(x, params, *, kernel_size, padding, eps=1e-5):
    Cin = x.shape[1]

    def bn(t, g, b):
        m = jnp.mean(t, axis=(0, 2, 3), keepdims=True)
        v = jnp.mean((t - m) ** 2, axis=(0, 2, 3), keepdims=True)
        return (t - m) * lax.rsqrt(v + eps) * g.reshape(1, -1, 1, 1) + b.reshape(1, -1, 1, 1)

    def conv(t, w_hwio, b, pad):
        o = lax.conv_general_dilated(
            t, w_hwio, (1, 1), [(pad, pad), (pad, pad)],
            dimension_numbers=("NCHW", "HWIO", "NCHW"),
            precision=jax.lax.Precision.HIGHEST)
        return o + b.reshape(1, -1, 1, 1)

    h = conv(jax.nn.relu(bn(x, params["gamma1"], params["beta1"])),
             params["w1"], params["b1"], padding)
    h = conv(jax.nn.relu(bn(h, params["gamma2"], params["beta2"])),
             params["w2"], params["b2"], padding)
    if "wc" in params:
        Cout = params["w2"].shape[-1]
        h = h + conv(x, params["wc"].reshape(1, 1, Cin, Cout), params["bc"], 0)
    else:
        h = h + x
    return h


def init_params(key, in_features, out_features, kernel_size):
    ks = jax.random.split(key, 10)
    k = kernel_size
    fan = (k * k * in_features) ** 0.5
    p = {
        "gamma1": 1.0 + 0.1 * jax.random.normal(ks[0], (in_features,), jnp.float32),
        "beta1": 0.1 * jax.random.normal(ks[1], (in_features,), jnp.float32),
        "gamma2": 1.0 + 0.1 * jax.random.normal(ks[2], (in_features,), jnp.float32),
        "beta2": 0.1 * jax.random.normal(ks[3], (in_features,), jnp.float32),
        # conv weights stored HWIO: (k, k, Cin, Cout)
        "w1": jax.random.normal(ks[4], (k, k, in_features, in_features), jnp.float32) / fan,
        "b1": 0.1 * jax.random.normal(ks[5], (in_features,), jnp.float32),
        "w2": jax.random.normal(ks[6], (k, k, in_features, out_features), jnp.float32) / fan,
        "b2": 0.1 * jax.random.normal(ks[7], (out_features,), jnp.float32),
    }
    if in_features != out_features:
        p["wc"] = jax.random.normal(ks[8], (in_features, out_features), jnp.float32) / in_features ** 0.5
        p["bc"] = 0.1 * jax.random.normal(ks[9], (out_features,), jnp.float32)
    return p
    # TODO(synk): BatchNorm running-stat (momentum) updates are training-time
    # state, not part of the forward output, so they are intentionally not modeled.


if __name__ == "__main__":
    key = jax.random.PRNGKey(0)
    kx, kp1, kp2 = jax.random.split(key, 3)
    x = jax.random.normal(kx, (2, 4, 16, 16), jnp.float32)   # NCHW, like PyTorch

    # Tolerance: activations travel as bf16 and both convs run as bf16 MXU
    # matmuls with f32 accumulation; the reference is exact f32.
    ATOL = RTOL = 5e-2

    # Case 1: in_features != out_features -> 1x1 channel_conv residual branch.
    # Uses the tiled-im2col conv form (v5e/v6e recommendation), 1 row tile.
    p1 = init_params(kp1, 4, 8, 3)
    y1 = resblock2d_forward(x, p1, kernel_size=3, padding=1,
                            conv_impl="im2col")
    jax.block_until_ready(y1)
    r1 = resblock2d_reference(x, p1, kernel_size=3, padding=1)
    assert y1.shape == (2, 8, 16, 16)
    assert jnp.allclose(y1, r1, atol=ATOL, rtol=RTOL), float(jnp.max(jnp.abs(y1 - r1)))

    # Case 2: in_features == out_features -> identity residual branch.
    # Uses the scratch-free k^2-matmul form (v7x recommendation) and a smaller
    # row tile so the multi-tile loop is exercised (2 tiles per image).
    p2 = init_params(kp2, 4, 4, 3)
    y2 = resblock2d_forward(x, p2, kernel_size=3, padding=1,
                            conv_impl="k2", tile_rows=128)
    jax.block_until_ready(y2)
    r2 = resblock2d_reference(x, p2, kernel_size=3, padding=1)
    assert y2.shape == (2, 4, 16, 16)
    assert jnp.allclose(y2, r2, atol=ATOL, rtol=RTOL), float(jnp.max(jnp.abs(y2 - r2)))

    print("KERNEL_OK")
</pallas_src>

<mosaic_0001>
module attributes {stable_mosaic.version = 11 : i64} {
  func.func @kernel(%arg0: i32, %arg1: memref<1x16x16x4xbf16, #tpu.memory_space<vmem>>, %arg2: memref<1x2x4xf32, #tpu.memory_space<vmem>>) attributes {dimension_semantics = [#tpu.dimension_semantics<parallel>], iteration_bounds = array<i64: 2>, scalar_prefetch = 0 : i64, scratch_operands = 0 : i64, tpu.core_type = #tpu.core_type<tc>, window_params = [{transform_indices = @transform_0, window_bounds = array<i64: 1, 16, 16, 4>}, {transform_indices = @transform_1, window_bounds = array<i64: 1, 2, 4>}]} {
    %c0 = arith.constant 0 : index
    %c0_0 = arith.constant 0 : index
    %c0_1 = arith.constant 0 : index
    %c0_2 = arith.constant 0 : index
    %0 = vector.load %arg1[%c0, %c0_0, %c0_1, %c0_2] : memref<1x16x16x4xbf16, #tpu.memory_space<vmem>>, vector<1x16x16x4xbf16>
    %1 = vector.shape_cast %0 : vector<1x16x16x4xbf16> to vector<256x4xbf16>
    %2 = arith.extf %1 : vector<256x4xbf16> to vector<256x4xf32>
    %cst = arith.constant dense<0.000000e+00> : vector<4xf32>
    %3 = vector.multi_reduction <add>, %2, %cst [0] : vector<256x4xf32> to vector<4xf32>
    %4 = vector.shape_cast %3 : vector<4xf32> to vector<1x4xf32>
    %c0_3 = arith.constant 0 : index
    %c0_4 = arith.constant 0 : index
    %c0_5 = arith.constant 0 : index
    %5 = vector.load %arg2[%c0_3, %c0_4, %c0_5] : memref<1x2x4xf32, #tpu.memory_space<vmem>>, vector<1x1x4xf32>
    %6 = vector.shape_cast %5 : vector<1x1x4xf32> to vector<1x4xf32>
    %7 = vector.shape_cast %4 : vector<1x4xf32> to vector<1x1x4xf32>
    tpu.vector_store %arg2[%c0_3, %c0_4, %c0_5], %7 {strides = array<i32>} : memref<1x2x4xf32, #tpu.memory_space<vmem>>, vector<1x1x4xf32>,
    %8 = arith.mulf %2, %2 : vector<256x4xf32>
    %cst_6 = arith.constant dense<0.000000e+00> : vector<4xf32>
    %9 = vector.multi_reduction <add>, %8, %cst_6 [0] : vector<256x4xf32> to vector<4xf32>
    %10 = vector.shape_cast %9 : vector<4xf32> to vector<1x4xf32>
    %c0_7 = arith.constant 0 : index
    %c1 = arith.constant 1 : index
    %c0_8 = arith.constant 0 : index
    %11 = vector.load %arg2[%c0_7, %c1, %c0_8] : memref<1x2x4xf32, #tpu.memory_space<vmem>>, vector<1x1x4xf32>
    %12 = vector.shape_cast %11 : vector<1x1x4xf32> to vector<1x4xf32>
    %13 = vector.shape_cast %10 : vector<1x4xf32> to vector<1x1x4xf32>
    tpu.vector_store %arg2[%c0_7, %c1, %c0_8], %13 {strides = array<i32>} : memref<1x2x4xf32, #tpu.memory_space<vmem>>, vector<1x1x4xf32>,
    return
  }
  func.func @transform_0(%arg0: i32) -> (i32, i32, i32, i32) {
    %c0_i32 = arith.constant 0 : i32
    %c0_i32_0 = arith.constant 0 : i32
    %c0_i32_1 = arith.constant 0 : i32
    %c0_i32_2 = arith.constant 0 : i32
    return %arg0, %c0_i32, %c0_i32_0, %c0_i32_1 : i32, i32, i32, i32
  }
  func.func @transform_1(%arg0: i32) -> (i32, i32, i32) {
    %c0_i32 = arith.constant 0 : i32
    %c0_i32_0 = arith.constant 0 : i32
    %c0_i32_1 = arith.constant 0 : i32
    return %arg0, %c0_i32, %c0_i32_0 : i32, i32, i32
  }
}

</mosaic_0001>

<llo_original>
// kernel: tpu_custom_call.1
$region0: #{tpu_custom_call.1}
  #allocation0 [shape = 'u32[]', space=smem, size = 0x4, offset = 0x4, fixed_abs, tag = 'smem constant byte address 0x4 - core index']
  #allocation1 [shape = 'u32[72,128]{1,0:T(1,128)}', space=vmem, size = 0x9000, scoped, tag = 'internal scratch']
  %s0 = inlined_call_operand.vmem [shape: bf16[2,16,16,4], index: 0, kind: input, shape index: {}]
  %s1 = inlined_call_operand.hbm [shape: f32[2,2,4], index: 1, kind: output, shape index: {}]
  %s2 = sld [smem:[#allocation0]]
  $region37: #{tpu_custom_call.1} parent=0
    _
  %s4 = ssub.s32 1, %s2
  %s5 = scalar_select 0, %s4, %s2
  $region1: #{tpu_custom_call.1} parent=0
    #allocation2 [shape = 'u8[2048]{0}', space=vmem, size = 0x800, scoped, tag = 'output window, operand 0']
    #allocation3 [shape = 's32[2]{0}', space=sflag, size = 0x8, scoped, tag = 'scoped memory for tpu_custom_call.1']
    %6 = vsyncpa [#allocation3], 0
    %s7 = scalar_lea.sflag [#allocation3], 1
    %8 = vsyncpa %s7, 0
    loop: start=0, step=1, limit=4
    $region2: #{tpu_custom_call.1} parent=1 // loop_pre_header
      _
    $region3: #{tpu_custom_call.1} parent=1 // loop_header
      %s10 = sphi 0, %s14
      %p11 = scmp.ge.s32.totalorder %s10, 4
      %s20 = sphi 0, %s22
      %s23 = sphi 0, %s20
      %s24 = sphi 0, %s23
      %s40 = sphi 0, %s24
      %s46 = sphi 0, %s48
      %s49 = sphi 0, %s46
      %s50 = sphi 0, %s49
      %s66 = sphi 0, %s50
    $region4: #{tpu_custom_call.1} parent=1 // loop_header_branch
      %13 = sbr.rel (%p11) target = $region8
    $region5: #{tpu_custom_call.1} parent=1 // loop_body
      %s15 = ssub.s32 %s10, 1
      %s16 = ssub.s32 %s10, 2
      %s17 = sadd.s32 %s10, 1
      %s18 = ssub.s32 %s10, %s17
      %p19 = scmp.eq.s32.totalorder %s18, 0
      %s21 = sadd.s32 %s20, 1
      %s22 = scalar_select %p19, %s20, %s21
      %p25 = pneg %p19
      %p26 = scmp.eq.s32.totalorder %s10, 1
      %p27 = por %p25, %p26
      %p28 = scmp.ne.s32.totalorder %s20, %s23
      %p29 = scmp.eq.s32.totalorder %s10, 0
      %p30 = por %p28, %p29
      %p31 = scmp.ne.s32.totalorder %s20, %s23
      %p32 = scmp.eq.s32.totalorder %s15, 1
      %p33 = por %p31, %p32
      %p34 = scmp.ne.s32.totalorder %s23, %s24
      %p35 = scmp.eq.s32.totalorder %s15, 0
      %p36 = por %p34, %p35
      %p37 = scmp.ne.s32.totalorder %s23, %s24
      %p38 = scmp.eq.s32.totalorder %s16, 1
      %p39 = por %p37, %p38
      %p41 = scmp.ne.s32.totalorder %s24, %s40
      %p42 = scmp.eq.s32.totalorder %s16, 0
      %p43 = por %p41, %p42
      %s44 = ssub.s32 %s10, %s17
      %p45 = scmp.eq.s32.totalorder %s44, 0
      %s47 = sadd.s32 %s46, 1
      %s48 = scalar_select %p45, %s46, %s47
      %p51 = pneg %p45
      %p52 = scmp.eq.s32.totalorder %s10, 1
      %p53 = por %p51, %p52
      %p54 = scmp.ne.s32.totalorder %s46, %s49
      %p55 = scmp.eq.s32.totalorder %s10, 0
      %p56 = por %p54, %p55
      %p57 = scmp.ne.s32.totalorder %s46, %s49
      %p58 = scmp.eq.s32.totalorder %s15, 1
      %p59 = por %p57, %p58
      %p60 = scmp.ne.s32.totalorder %s49, %s50
      %p61 = scmp.eq.s32.totalorder %s15, 0
      %p62 = por %p60, %p61
      %p63 = scmp.ne.s32.totalorder %s49, %s50
      %p64 = scmp.eq.s32.totalorder %s16, 1
      %p65 = por %p63, %p64
      %p67 = scmp.ne.s32.totalorder %s50, %s66
      %p68 = scmp.eq.s32.totalorder %s16, 0
      %p69 = por %p67, %p68
      %p70 = scmp.le.s32.totalorder 1, %s10
      %p71 = scmp.lt.s32.totalorder %s10, 3
      %p72 = pnand %p70, %p71
      %p73 = pneg %p72
      // Predicated region
      $region9: #{tpu_custom_call.1} parent=5 // pred_check
        _
      $region10: #{tpu_custom_call.1} parent=5 // pred_check_branch
        %75 = sbr.rel (%p72) target = $region12
      $region11: #{tpu_custom_call.1} parent=5 // pred_region
        %s76 = ssub.s32 %s10, 1
      $region12: #{tpu_custom_call.1} parent=5 // pred_fallthru
        _
      %p77 = scmp.lt.s32.totalorder %s10, 2
      // Predicated region
      $region13: #{tpu_custom_call.1} parent=5 // pred_check
        %p78 = pneg %p77
      $region14: #{tpu_custom_call.1} parent=5 // pred_check_branch
        %80 = sbr.rel (%p78) target = $region16
      $region15: #{tpu_custom_call.1} parent=5 // pred_region
        // Predicated region
        $region17: #{tpu_custom_call.1} parent=15 // pred_check
          %p81 = pneg %p30
        $region18: #{tpu_custom_call.1} parent=15 // pred_check_branch
          %83 = sbr.rel (%p81) target = $region20
        $region19: #{tpu_custom_call.1} parent=15 // pred_region
          %p84 = scmp.lt.s32.totalorder %s10, 1
          %s85 = scalar_select %p84, %s10, 1
          %s86 = smul.addr %s85, 32
          %s87 = smul.addr %s86, 4
          %s88 = scalar_lea.vmem %s0, %s87
        $region20: #{tpu_custom_call.1} parent=15 // pred_fallthru
          _
      $region16: #{tpu_custom_call.1} parent=5 // pred_fallthru
        _
      %p89 = scmp.le.s32.totalorder 1, %s10
      %p90 = scmp.lt.s32.totalorder %s10, 3
      %p91 = pnand %p89, %p90
      %p92 = pneg %p91
      // Predicated region
      $region21: #{tpu_custom_call.1} parent=5 // pred_check
        _
      $region22: #{tpu_custom_call.1} parent=5 // pred_check_branch
        %94 = sbr.rel (%p91) target = $region24
      $region23: #{tpu_custom_call.1} parent=5 // pred_region
        %s95 = ssub.s32 %s10, 1
        %p96 = scmp.lt.s32.totalorder %s15, 1
        %s97 = scalar_select %p96, %s15, 1
        %s98 = smul.addr %s97, 32
        %s99 = smul.addr %s98, 4
        %s100 = scalar_lea.vmem %s0, %s99
        %p101 = pneg %p36
        %p102 = pneg %p33
        %p103 = pneg %p62
        %p104 = pneg %p59
        %s105 = sand.u32 %s49, 1
        %s106 = scalar_lea.sflag [#allocation3], %s105
        %s107 = sand.u32 %s49, 1
        %s108 = smul.addr %s107, 2
        %s109 = scalar_lea.vmem [#allocation2], %s108
        %p110 = scmp.lt.s32.totalorder %s15, 1
        %s111 = scalar_select %p110, %s15, 1
        %s112 = smul.addr %s111, 32
        %s113 = smul.addr %s112, 4
        %s114 = scalar_lea.vmem %s0, %s113
        %v115 = vld [vmem:[%s114] sm:$0xf]
        %v116 = vld [vmem:[%s114 + $0x4] sm:$0xf]
        %v117 = vld [vmem:[%s114 + $0x8] sm:$0xf]
        %v118 = vld [vmem:[%s114 + $0xc] sm:$0xf]
        %v119 = vld [vmem:[%s114 + $0x10] sm:$0xf]
        %v120 = vld [vmem:[%s114 + $0x14] sm:$0xf]
        %v121 = vld [vmem:[%s114 + $0x18] sm:$0xf]
        %v122 = vld [vmem:[%s114 + $0x1c] sm:$0xf]
        %v123 = vld [vmem:[%s114 + $0x20] sm:$0xf]
        %v124 = vld [vmem:[%s114 + $0x24] sm:$0xf]
        %v125 = vld [vmem:[%s114 + $0x28] sm:$0xf]
        %v126 = vld [vmem:[%s114 + $0x2c] sm:$0xf]
        %v127 = vld [vmem:[%s114 + $0x30] sm:$0xf]
        %v128 = vld [vmem:[%s114 + $0x34] sm:$0xf]
        %v129 = vld [vmem:[%s114 + $0x38] sm:$0xf]
        %v130 = vld [vmem:[%s114 + $0x3c] sm:$0xf]
        %v131 = vld [vmem:[%s114 + $0x40] sm:$0xf]
        %v132 = vld [vmem:[%s114 + $0x44] sm:$0xf]
        %v133 = vld [vmem:[%s114 + $0x48] sm:$0xf]
        %v134 = vld [vmem:[%s114 + $0x4c] sm:$0xf]
        %v135 = vld [vmem:[%s114 + $0x50] sm:$0xf]
        %v136 = vld [vmem:[%s114 + $0x54] sm:$0xf]
        %v137 = vld [vmem:[%s114 + $0x58] sm:$0xf]
        %v138 = vld [vmem:[%s114 + $0x5c] sm:$0xf]
        %v139 = vld [vmem:[%s114 + $0x60] sm:$0xf]
        %v140 = vld [vmem:[%s114 + $0x64] sm:$0xf]
        %v141 = vld [vmem:[%s114 + $0x68] sm:$0xf]
        %v142 = vld [vmem:[%s114 + $0x6c] sm:$0xf]
        %v143 = vld [vmem:[%s114 + $0x70] sm:$0xf]
        %v144 = vld [vmem:[%s114 + $0x74] sm:$0xf]
        %v145 = vld [vmem:[%s114 + $0x78] sm:$0xf]
        %v146 = vld [vmem:[%s114 + $0x7c] sm:$0xf]
        %v147 = vunpack.c.l.bf16 %v115
        %v148 = vunpack.c.l.bf16 %v116
        %v149 = vunpack.c.l.bf16 %v117
        %v150 = vunpack.c.l.bf16 %v118
        %v151 = vunpack.c.l.bf16 %v119
        %v152 = vunpack.c.l.bf16 %v120
        %v153 = vunpack.c.l.bf16 %v121
        %v154 = vunpack.c.l.bf16 %v122
        %v155 = vunpack.c.l.bf16 %v123
        %v156 = vunpack.c.l.bf16 %v124
        %v157 = vunpack.c.l.bf16 %v125
        %v158 = vunpack.c.l.bf16 %v126
        %v159 = vunpack.c.l.bf16 %v127
        %v160 = vunpack.c.l.bf16 %v128
        %v161 = vunpack.c.l.bf16 %v129
        %v162 = vunpack.c.l.bf16 %v130
        %v163 = vunpack.c.l.bf16 %v131
        %v164 = vunpack.c.l.bf16 %v132
        %v165 = vunpack.c.l.bf16 %v133
        %v166 = vunpack.c.l.bf16 %v134
        %v167 = vunpack.c.l.bf16 %v135
        %v168 = vunpack.c.l.bf16 %v136
        %v169 = vunpack.c.l.bf16 %v137
        %v170 = vunpack.c.l.bf16 %v138
        %v171 = vunpack.c.l.bf16 %v139
        %v172 = vunpack.c.l.bf16 %v140
        %v173 = vunpack.c.l.bf16 %v141
        %v174 = vunpack.c.l.bf16 %v142
        %v175 = vunpack.c.l.bf16 %v143
        %v176 = vunpack.c.l.bf16 %v144
        %v177 = vunpack.c.l.bf16 %v145
        %v178 = vunpack.c.l.bf16 %v146
        %vm179 = vcmask 31744
        %v180 = vsel %vm179, %v147, 0.0
        %v181 = vsel %vm179, %v148, 0.0
        %v182 = vadd.f32 %v180, %v181
        %v183 = vsel %vm179, %v149, 0.0
        %v184 = vadd.f32 %v182, %v183
        %v185 = vsel %vm179, %v150, 0.0
        %v186 = vadd.f32 %v184, %v185
        %v187 = vsel %vm179, %v151, 0.0
        %v188 = vadd.f32 %v186, %v187
        %v189 = vsel %vm179, %v152, 0.0
        %v190 = vadd.f32 %v188, %v189
        %v191 = vsel %vm179, %v153, 0.0
        %v192 = vadd.f32 %v190, %v191
        %v193 = vsel %vm179, %v154, 0.0
        %v194 = vadd.f32 %v192, %v193
        %v195 = vsel %vm179, %v155, 0.0
        %v196 = vadd.f32 %v194, %v195
        %v197 = vsel %vm179, %v156, 0.0
        %v198 = vadd.f32 %v196, %v197
        %v199 = vsel %vm179, %v157, 0.0
        %v200 = vadd.f32 %v198, %v199
        %v201 = vsel %vm179, %v158, 0.0
        %v202 = vadd.f32 %v200, %v201
        %v203 = vsel %vm179, %v159, 0.0
        %v204 = vadd.f32 %v202, %v203
        %v205 = vsel %vm179, %v160, 0.0
        %v206 = vadd.f32 %v204, %v205
        %v207 = vsel %vm179, %v161, 0.0
        %v208 = vadd.f32 %v206, %v207
        %v209 = vsel %vm179, %v162, 0.0
        %v210 = vadd.f32 %v208, %v209
        %v211 = vsel %vm179, %v163, 0.0
        %v212 = vadd.f32 %v210, %v211
        %v213 = vsel %vm179, %v164, 0.0
        %v214 = vadd.f32 %v212, %v213
        %v215 = vsel %vm179, %v165, 0.0
        %v216 = vadd.f32 %v214, %v215
        %v217 = vsel %vm179, %v166, 0.0
        %v218 = vadd.f32 %v216, %v217
        %v219 = vsel %vm179, %v167, 0.0
        %v220 = vadd.f32 %v218, %v219
        %v221 = vsel %vm179, %v168, 0.0
        %v222 = vadd.f32 %v220, %v221
        %v223 = vsel %vm179, %v169, 0.0
        %v224 = vadd.f32 %v222, %v223
        %v225 = vsel %vm179, %v170, 0.0
        %v226 = vadd.f32 %v224, %v225
        %v227 = vsel %vm179, %v171, 0.0
        %v228 = vadd.f32 %v226, %v227
        %v229 = vsel %vm179, %v172, 0.0
        %v230 = vadd.f32 %v228, %v229
        %v231 = vsel %vm179, %v173, 0.0
        %v232 = vadd.f32 %v230, %v231
        %v233 = vsel %vm179, %v174, 0.0
        %v234 = vadd.f32 %v232, %v233
        %v235 = vsel %vm179, %v175, 0.0
        %v236 = vadd.f32 %v234, %v235
        %v237 = vsel %vm179, %v176, 0.0
        %v238 = vadd.f32 %v236, %v237
        %v239 = vsel %vm179, %v177, 0.0
        %v240 = vadd.f32 %v238, %v239
        %v241 = vsel %vm179, %v178, 0.0
        %v242 = vadd.f32 %v240, %v241
        %v243 = vrot.slane %v242, 4
        %v244 = vadd.f32 %v242, %v243
        %v245 = vrot.slane %v244, 2
        %v246 = vadd.f32 %v244, %v245
        %v247 = vrot.slane %v246, 1
        %v248 = vadd.f32 %v246, %v247
        %vm249 = vcmask 24576
        %250 = vst.msk [vmem:[%s109] sm:$0x1] %vm249, %v248
        %v251 = vmul.f32 %v147, %v147
        %v252 = vmul.f32 %v148, %v148
        %v253 = vmul.f32 %v149, %v149
        %v254 = vmul.f32 %v150, %v150
        %v255 = vmul.f32 %v151, %v151
        %v256 = vmul.f32 %v152, %v152
        %v257 = vmul.f32 %v153, %v153
        %v258 = vmul.f32 %v154, %v154
        %v259 = vmul.f32 %v155, %v155
        %v260 = vmul.f32 %v156, %v156
        %v261 = vmul.f32 %v157, %v157
        %v262 = vmul.f32 %v158, %v158
        %v263 = vmul.f32 %v159, %v159
        %v264 = vmul.f32 %v160, %v160
        %v265 = vmul.f32 %v161, %v161
        %v266 = vmul.f32 %v162, %v162
        %v267 = vmul.f32 %v163, %v163
        %v268 = vmul.f32 %v164, %v164
        %v269 = vmul.f32 %v165, %v165
        %v270 = vmul.f32 %v166, %v166
        %v271 = vmul.f32 %v167, %v167
        %v272 = vmul.f32 %v168, %v168
        %v273 = vmul.f32 %v169, %v169
        %v274 = vmul.f32 %v170, %v170
        %v275 = vmul.f32 %v171, %v171
        %v276 = vmul.f32 %v172, %v172
        %v277 = vmul.f32 %v173, %v173
        %v278 = vmul.f32 %v174, %v174
        %v279 = vmul.f32 %v175, %v175
        %v280 = vmul.f32 %v176, %v176
        %v281 = vmul.f32 %v177, %v177
        %v282 = vmul.f32 %v178, %v178
        %v283 = vsel %vm179, %v251, 0.0
        %v284 = vsel %vm179, %v252, 0.0
        %v285 = vadd.f32 %v283, %v284
        %v286 = vsel %vm179, %v253, 0.0
        %v287 = vadd.f32 %v285, %v286
        %v288 = vsel %vm179, %v254, 0.0
        %v289 = vadd.f32 %v287, %v288
        %v290 = vsel %vm179, %v255, 0.0
        %v291 = vadd.f32 %v289, %v290
        %v292 = vsel %vm179, %v256, 0.0
        %v293 = vadd.f32 %v291, %v292
        %v294 = vsel %vm179, %v257, 0.0
        %v295 = vadd.f32 %v293, %v294
        %v296 = vsel %vm179, %v258, 0.0
        %v297 = vadd.f32 %v295, %v296
        %v298 = vsel %vm179, %v259, 0.0
        %v299 = vadd.f32 %v297, %v298
        %v300 = vsel %vm179, %v260, 0.0
        %v301 = vadd.f32 %v299, %v300
        %v302 = vsel %vm179, %v261, 0.0
        %v303 = vadd.f32 %v301, %v302
        %v304 = vsel %vm179, %v262, 0.0
        %v305 = vadd.f32 %v303, %v304
        %v306 = vsel %vm179, %v263, 0.0
        %v307 = vadd.f32 %v305, %v306
        %v308 = vsel %vm179, %v264, 0.0
        %v309 = vadd.f32 %v307, %v308
        %v310 = vsel %vm179, %v265, 0.0
        %v311 = vadd.f32 %v309, %v310
        %v312 = vsel %vm179, %v266, 0.0
        %v313 = vadd.f32 %v311, %v312
        %v314 = vsel %vm179, %v267, 0.0
        %v315 = vadd.f32 %v313, %v314
        %v316 = vsel %vm179, %v268, 0.0
        %v317 = vadd.f32 %v315, %v316
        %v318 = vsel %vm179, %v269, 0.0
        %v319 = vadd.f32 %v317, %v318
        %v320 = vsel %vm179, %v270, 0.0
        %v321 = vadd.f32 %v319, %v320
        %v322 = vsel %vm179, %v271, 0.0
        %v323 = vadd.f32 %v321, %v322
        %v324 = vsel %vm179, %v272, 0.0
        %v325 = vadd.f32 %v323, %v324
        %v326 = vsel %vm179, %v273, 0.0
        %v327 = vadd.f32 %v325, %v326
        %v328 = vsel %vm179, %v274, 0.0
        %v329 = vadd.f32 %v327, %v328
        %v330 = vsel %vm179, %v275, 0.0
        %v331 = vadd.f32 %v329, %v330
        %v332 = vsel %vm179, %v276, 0.0
        %v333 = vadd.f32 %v331, %v332
        %v334 = vsel %vm179, %v277, 0.0
        %v335 = vadd.f32 %v333, %v334
        %v336 = vsel %vm179, %v278, 0.0
        %v337 = vadd.f32 %v335, %v336
        %v338 = vsel %vm179, %v279, 0.0
        %v339 = vadd.f32 %v337, %v338
        %v340 = vsel %vm179, %v280, 0.0
        %v341 = vadd.f32 %v339, %v340
        %v342 = vsel %vm179, %v281, 0.0
        %v343 = vadd.f32 %v341, %v342
        %v344 = vsel %vm179, %v282, 0.0
        %v345 = vadd.f32 %v343, %v344
        %v346 = vrot.slane %v345, 4
        %v347 = vadd.f32 %v345, %v346
        %v348 = vrot.slane %v347, 2
        %v349 = vadd.f32 %v347, %v348
        %v350 = vrot.slane %v349, 1
        %v351 = vadd.f32 %v349, %v350
        %352 = vst.msk [vmem:[%s109 + $0x1] sm:$0x1] %vm249, %v351
        %s353 = sand.u32 %s49, 1
        %s354 = scalar_lea.sflag [#allocation3], %s353
        %s355 = sand.u32 %s49, 1
        %s356 = smul.addr %s355, 2
        %s357 = scalar_lea.vmem [#allocation2], %s356
        // Predicated region
        $region25: #{tpu_custom_call.1} parent=23 // pred_check
          %p358 = pneg %p59
        $region26: #{tpu_custom_call.1} parent=23 // pred_check_branch
          %360 = sbr.rel (%p358) target = $region28
        $region27: #{tpu_custom_call.1} parent=23 // pred_region
          %362 = vsyncadd %s354, 0
          %s363 = smul.addr %s15, 2
          %s364 = scalar_lea.hbm %s1, %s363
          %s366 = sshll.u32 %s357, 4
          %s367 = int_to_ptr.vmem [resolvable:$true] %s366
          %s368 = sshll.u32 %s364, 4
          %s369 = int_to_ptr.hbm [resolvable:$true] %s368
          %371 = dma.vmem_to_hbm [thread:$0]  %s367, 32, %s369, %s354
        $region28: #{tpu_custom_call.1} parent=23 // pred_fallthru
          _
      $region24: #{tpu_custom_call.1} parent=5 // pred_fallthru
        _
      %p372 = scmp.le.s32.totalorder 2, %s10
      // Predicated region
      $region29: #{tpu_custom_call.1} parent=5 // pred_check
        %p373 = pneg %p372
      $region30: #{tpu_custom_call.1} parent=5 // pred_check_branch
        %375 = sbr.rel (%p373) target = $region32
      $region31: #{tpu_custom_call.1} parent=5 // pred_region
        %s376 = ssub.s32 %s10, 2
        // Predicated region
        $region33: #{tpu_custom_call.1} parent=31 // pred_check
          %p377 = pneg %p65
        $region34: #{tpu_custom_call.1} parent=31 // pred_check_branch
          %379 = sbr.rel (%p377) target = $region36
        $region35: #{tpu_custom_call.1} parent=31 // pred_region
          %s380 = sand.u32 %s50, 1
          %s381 = scalar_lea.sflag [#allocation3], %s380
          %s382 = sand.u32 %s50, 1
          %s383 = smul.addr %s382, 2
          %s384 = scalar_lea.vmem [#allocation2], %s383
          %386 = dma.done %s381, 32
        $region36: #{tpu_custom_call.1} parent=31 // pred_fallthru
          _
      $region32: #{tpu_custom_call.1} parent=5 // pred_fallthru
        _
    $region6: #{tpu_custom_call.1} parent=1 // loop_footer
      %s14 = sadd.s32 1, %s10
    $region7: #{tpu_custom_call.1} parent=1 // loop_footer_branch
      %9 = sbr.rel target = $region3
    $region8: #{tpu_custom_call.1} parent=1 // loop_exit
      _
    %387 = vsyncpa [#allocation3], 1
    %s388 = scalar_lea.sflag [#allocation3], 1
    %389 = vsyncpa %s388, 1

</llo_original>
